<compile_context>
chip_gen: v7x
topology: tpu7x:2x2x1
jax: 0.10.0
libtpu: 0.0.40
codegen_flags: <defaults>
</compile_context>

<pallas_src>
import functools
import math

import jax
import jax.numpy as jnp
from jax import lax
from jax.experimental import pallas as pl
from jax.experimental.pallas import tpu as pltpu


def _round_up(x, m):
    return ((x + m - 1) // m) * m


def _vmem_capacity_bytes():
    try:
        return int(pltpu.get_tpu_info().vmem_capacity_bytes)
    except Exception:
        return 64 * 1024 * 1024  # conservative fallback: v7x physical VMEM


def _budgets():
    cap = _vmem_capacity_bytes()
    usable = max(32 << 20, cap - (8 << 20))      # leave headroom below physical
    per_buf = (16 << 20) if cap >= (100 << 20) else (6 << 20)   # v5e/v6e vs v7x
    return per_buf, usable


def _pick_hw_tiling(hw, d, itemsize, per_buf_budget):
    """Multiple-of-128 hw tile + padded extent + tile count (no divisor req)."""
    hw128 = _round_up(hw, 128)
    max_elems = max(128, per_buf_budget // (itemsize * max(1, d)))
    t = max(128, min((max_elems // 128) * 128, hw128))
    t = max(t, min(hw128, 512))                  # floor: contiguous DMA runs
    n_tiles = -(-hw128 // t)
    t = _round_up(-(-hw128 // n_tiles), 128)     # balance tiles, minimize padding
    hw_pad = n_tiles * t
    return t, hw_pad, n_tiles


# ----------------------------- Pass A: statistics ----------------------------

def _stats_kernel(x_ref, sx_ref, sxx_ref):
    x = x_ref[...]                                           # (d, thw), input dtype
    # Spatial sum on the MXU via a ones-vector contraction -> (1, d), lane-dense.
    ones = jnp.ones((1, x.shape[1]), dtype=x.dtype)
    sx_ref[...] = lax.dot_general(ones, x, (((1,), (1,)), ((), ())),
                                  preferred_element_type=jnp.float32)
    # x @ x^T with f32 accumulation directly in the MXU -> (d, d) partial.
    sxx_ref[...] = lax.dot_general(x, x, (((1,), (1,)), ((), ())),
                                   preferred_element_type=jnp.float32)


def _stats_pass(x4, *, g, d, n, hw_pad, thw, n_tiles, vmem_limit):
    itemsize = jnp.dtype(x4.dtype).itemsize
    cost = pl.CostEstimate(
        flops=2 * n * g * (d + 1) * d * hw_pad,
        transcendentals=0,
        bytes_accessed=x4.size * itemsize + n * g * n_tiles * (d + d * d) * 4)
    return pl.pallas_call(
        _stats_kernel,
        out_shape=(
            jax.ShapeDtypeStruct((n, g, n_tiles, 1, d), jnp.float32),
            jax.ShapeDtypeStruct((n, g, n_tiles, d, d), jnp.float32),
        ),
        grid_spec=pltpu.PrefetchScalarGridSpec(
            num_scalar_prefetch=0,
            grid=(n, g, n_tiles),
            in_specs=[
                pl.BlockSpec((None, None, d, thw),
                             lambda ni, gi, ti: (ni, gi, 0, ti)),
            ],
            out_specs=(
                pl.BlockSpec((None, None, None, 1, d),
                             lambda ni, gi, ti: (ni, gi, ti, 0, 0)),
                pl.BlockSpec((None, None, None, d, d),
                             lambda ni, gi, ti: (ni, gi, ti, 0, 0)),
            ),
        ),
        compiler_params=pltpu.CompilerParams(
            dimension_semantics=("parallel", "parallel", "parallel"),
            vmem_limit_bytes=vmem_limit),
        cost_estimate=cost,
    )(x4)


# ------------------------ Pass B: whitening + affine --------------------------

def _whiten_kernel(x_ref, wm_ref, b_ref, out_ref):
    # Plain (d, d) @ (d, thw) on the MXU, f32 accumulation; lane-dense output.
    xn = lax.dot_general(wm_ref[...], x_ref[...], (((1,), (0,)), ((), ())),
                         preferred_element_type=jnp.float32)
    out_ref[...] = (xn + b_ref[...]).astype(out_ref.dtype)


def _whiten_pass(x4, wm_scaled, b_adj, *, g, d, n, hw_pad, thw, n_tiles,
                 vmem_limit):
    itemsize = jnp.dtype(x4.dtype).itemsize
    cost = pl.CostEstimate(
        flops=2 * n * g * d * d * hw_pad,
        transcendentals=0,
        bytes_accessed=2 * x4.size * itemsize + g * (d * d + d) * 4)
    return pl.pallas_call(
        _whiten_kernel,
        out_shape=jax.ShapeDtypeStruct(x4.shape, x4.dtype),
        grid_spec=pltpu.PrefetchScalarGridSpec(
            num_scalar_prefetch=0,
            grid=(n, g, n_tiles),
            in_specs=[
                pl.BlockSpec((None, None, d, thw),
                             lambda ni, gi, ti: (ni, gi, 0, ti)),
                pl.BlockSpec((None, d, d), lambda ni, gi, ti: (gi, 0, 0)),
                pl.BlockSpec((None, d, 1), lambda ni, gi, ti: (gi, 0, 0)),
            ],
            out_specs=pl.BlockSpec((None, None, d, thw),
                                   lambda ni, gi, ti: (ni, gi, 0, ti)),
        ),
        compiler_params=pltpu.CompilerParams(
            dimension_semantics=("parallel", "parallel", "parallel"),
            vmem_limit_bytes=vmem_limit),
        cost_estimate=cost,
    )(x4, wm_scaled, b_adj)


# --------------------------------- Forward ------------------------------------

def iter_norm_forward(X, weight, bias, running_mean, running_wm, *,
                      num_channels, T=10, eps=1e-5, momentum=0.1):
    """Training-branch semantics of IterNormMod.forward (grad-enabled path)."""
    N, C = X.shape[0], X.shape[1]
    d = num_channels
    g = C // d
    spatial = X.shape[2:]
    HW = int(math.prod(spatial)) if spatial else 1
    m = N * HW

    itemsize = jnp.dtype(X.dtype).itemsize
    per_buf, usable_vmem = _budgets()
    thw, hw_pad, n_tiles = _pick_hw_tiling(HW, d, itemsize, per_buf)

    # Free relayout only: (N, C, ...) -> (N, g, d, HW); pad hw to a tile multiple.
    # Zero padding contributes nothing to the uncentered sums (m uses true HW).
    x4 = X.reshape(N, g, d, HW)
    if hw_pad != HW:
        x4 = jnp.pad(x4, ((0, 0), (0, 0), (0, 0), (0, hw_pad - HW)))

    # Generation-aware VMEM limit: double-buffered in+out tiles, the f32 matmul
    # intermediate of Pass B, tiny wm/bias blocks, plus headroom; clamped below
    # physical capacity (56 MiB-ish on v7x, more on v5e/v6e).
    tile_in = d * thw * itemsize
    f32_tmp = d * thw * 4
    need = 4 * tile_in + f32_tmp + 4 * (d * d + d) * 4 + (4 << 20)
    vmem_limit = int(min(usable_vmem, max(32 << 20, need)))

    # --- Pass A: streaming statistics (all sums on the MXU) ------------------
    sx_t, sxx_t = _stats_pass(x4, g=g, d=d, n=N, hw_pad=hw_pad, thw=thw,
                              n_tiles=n_tiles, vmem_limit=vmem_limit)
    sum_x_row = jnp.sum(sx_t, axis=(0, 2))      # (g, 1, d)  f32
    sum_xx = jnp.sum(sxx_t, axis=(0, 2))        # (g, d, d)  f32

    # --- Tiny (g, d, d) math in plain JAX (hoisted out of the streaming loops)
    inv_m = 1.0 / m
    mean_row = sum_x_row * inv_m                # (g, 1, d)
    mean_col = jnp.swapaxes(mean_row, 1, 2)     # (g, d, 1)
    eye = jnp.eye(d, dtype=jnp.float32)
    sigma = sum_xx * inv_m - mean_col * mean_row + eps * eye
    # TODO(synk): apply_fix_cov=True branch (fix_cov on Sigma[0]) not implemented;
    # the module default is fix_cov=False.

    trace = jnp.sum(sigma * eye, axis=(1, 2), keepdims=True)   # (g, 1, 1)
    rTr = 1.0 / trace
    sigma_n = sigma * rTr

    P = jnp.broadcast_to(eye, (g, d, d))
    for _ in range(T):
        # P^3 @ Sigma_N, reassociated as P @ (P @ (P @ Sigma_N)).
        t = jnp.einsum('gij,gjk->gik', P, sigma_n)
        t = jnp.einsum('gij,gjk->gik', P, t)
        t = jnp.einsum('gij,gjk->gik', P, t)
        P = 1.5 * P - 0.5 * t
    wm = P * jnp.sqrt(rTr)                      # (g, d, d)

    # Fold affine scale into wm and (bias - scaled_wm @ mean) into one add, so
    # the streaming pass is a single matmul + add:  y = (w*wm) @ x + b_adj.
    w_gd = weight.reshape(g, d).astype(jnp.float32)
    b_gd = bias.reshape(g, d).astype(jnp.float32)
    wm_scaled = wm * w_gd[:, :, None]           # (g, d, d)
    b_adj = (b_gd - jnp.einsum('gij,gj->gi', wm_scaled,
                               mean_col[:, :, 0]))[:, :, None]

    # --- Pass B: streaming whitening + affine --------------------------------
    xhat4 = _whiten_pass(x4, wm_scaled.astype(X.dtype), b_adj,
                         g=g, d=d, n=N, hw_pad=hw_pad, thw=thw,
                         n_tiles=n_tiles, vmem_limit=vmem_limit)
    if hw_pad != HW:
        xhat4 = xhat4[..., :HW]
    X_hat = xhat4.reshape(X.shape)

    new_running_mean = (1.0 - momentum) * running_mean + momentum * mean_col
    new_running_wm = (1.0 - momentum) * running_wm + momentum * wm
    return X_hat, new_running_mean, new_running_wm


# ---------------------------- Pure-JAX reference -------------------------------

def _reference_forward(X, weight, bias, *, num_channels, T=10, eps=1e-5):
    """Pure-JAX reference of the original (transpose + centered) formulation."""
    C, N = X.shape[1], X.shape[0]
    d = num_channels
    g = C // d
    perm = (1, 0) + tuple(range(2, X.ndim))
    x = jnp.transpose(X, perm).reshape(g, d, -1).astype(jnp.float32)
    m = x.shape[-1]
    mean = jnp.mean(x, -1, keepdims=True)
    xc = x - mean
    eye = jnp.broadcast_to(jnp.eye(d, dtype=jnp.float32), (g, d, d))
    sigma = eps * eye + jnp.einsum('gdm,gem->gde', xc, xc) / m
    rTr = 1.0 / jnp.sum(sigma * eye, axis=(1, 2), keepdims=True)
    sigma_n = sigma * rTr
    P = eye
    for _ in range(T):
        P3 = jnp.einsum('gab,gbc->gac', jnp.einsum('gab,gbc->gac', P, P), P)
        P = 1.5 * P - 0.5 * jnp.einsum('gab,gbc->gac', P3, sigma_n)
    wm = P * jnp.sqrt(rTr)
    xn = jnp.einsum('gde,gem->gdm', wm, xc)
    X_hat = jnp.transpose(xn.reshape((C, N) + X.shape[2:]), perm)
    return X_hat * weight + bias


if __name__ == "__main__":
    # Small shapes consistent with a dim=4 (NCHW) IterNormMod.
    N, C, H, W = 2, 4, 16, 16
    num_features = C
    num_groups = 1
    num_channels = (num_features - 1) // num_groups + 1   # == 4
    T, eps, momentum = 10, 1e-5, 0.1

    key = jax.random.PRNGKey(0)
    X = jax.random.normal(key, (N, C, H, W), dtype=jnp.float32)

    # Deterministic parameter init (matches reset_parameters / buffer init).
    weight = jnp.ones((1, C, 1, 1), jnp.float32)
    bias = jnp.zeros((1, C, 1, 1), jnp.float32)
    running_mean = jnp.zeros((num_groups, num_channels, 1), jnp.float32)
    running_wm = jnp.broadcast_to(
        jnp.eye(num_channels, dtype=jnp.float32),
        (num_groups, num_channels, num_channels)).astype(jnp.float32)

    fwd = jax.jit(functools.partial(
        iter_norm_forward, num_channels=num_channels, T=T, eps=eps,
        momentum=momentum))

    X_hat, new_rm, new_rwm = fwd(X, weight, bias, running_mean, running_wm)
    jax.block_until_ready((X_hat, new_rm, new_rwm))

    # Sanity check against a pure-JAX reference.
    ref = _reference_forward(X, weight, bias, num_channels=num_channels,
                             T=T, eps=eps)
    err = float(jnp.max(jnp.abs(X_hat - ref)))
    assert err < 2e-3, f"mismatch vs reference: {err}"

    print("KERNEL_OK")
</pallas_src>

<mosaic_0001>
module attributes {stable_mosaic.version = 11 : i64} {
  func.func @_stats_kernel(%arg0: i32, %arg1: i32, %arg2: i32, %arg3: memref<1x1x4x256xf32, #tpu.memory_space<vmem>>, %arg4: memref<1x1x1x1x4xf32, #tpu.memory_space<vmem>>, %arg5: memref<1x1x1x4x4xf32, #tpu.memory_space<vmem>>) attributes {dimension_semantics = [#tpu.dimension_semantics<parallel>, #tpu.dimension_semantics<parallel>, #tpu.dimension_semantics<parallel>], iteration_bounds = array<i64: 2, 1, 1>, scalar_prefetch = 0 : i64, scratch_operands = 0 : i64, tpu.core_type = #tpu.core_type<tc>, window_params = [{transform_indices = @transform_0, window_bounds = array<i64: 1, 1, 4, 256>}, {transform_indices = @transform_1, window_bounds = array<i64: 1, 1, 1, 1, 4>}, {transform_indices = @transform_2, window_bounds = array<i64: 1, 1, 1, 4, 4>}]} {
    %c0 = arith.constant 0 : index
    %c0_0 = arith.constant 0 : index
    %c0_1 = arith.constant 0 : index
    %c0_2 = arith.constant 0 : index
    %0 = vector.load %arg3[%c0, %c0_0, %c0_1, %c0_2] : memref<1x1x4x256xf32, #tpu.memory_space<vmem>>, vector<1x1x4x256xf32>
    %1 = vector.shape_cast %0 : vector<1x1x4x256xf32> to vector<4x256xf32>
    %cst = arith.constant 1.000000e+00 : f32
    %2 = vector.broadcast %cst : f32 to vector<1x256xf32>
    %cst_3 = arith.constant dense<0.000000e+00> : vector<1x4xf32>
    %3 = tpu.matmul %2, %1, %cst_3 {dimension_numbers = #tpu.dot_dimension_numbers<[1], [1], [0], [0], [0, 0, 1, 0], [], []>} : vector<1x256xf32>, vector<4x256xf32>, vector<1x4xf32> -> vector<1x4xf32>
    %c0_4 = arith.constant 0 : index
    %c0_5 = arith.constant 0 : index
    %c0_6 = arith.constant 0 : index
    %c0_7 = arith.constant 0 : index
    %c0_8 = arith.constant 0 : index
    %4 = vector.load %arg4[%c0_4, %c0_5, %c0_6, %c0_7, %c0_8] : memref<1x1x1x1x4xf32, #tpu.memory_space<vmem>>, vector<1x1x1x1x4xf32>
    %5 = vector.shape_cast %4 : vector<1x1x1x1x4xf32> to vector<1x4xf32>
    %6 = vector.shape_cast %3 : vector<1x4xf32> to vector<1x1x1x1x4xf32>
    tpu.vector_store %arg4[%c0_4, %c0_5, %c0_6, %c0_7, %c0_8], %6 {strides = array<i32>} : memref<1x1x1x1x4xf32, #tpu.memory_space<vmem>>, vector<1x1x1x1x4xf32>,
    %cst_9 = arith.constant dense<0.000000e+00> : vector<4x4xf32>
    %7 = tpu.matmul %1, %1, %cst_9 {dimension_numbers = #tpu.dot_dimension_numbers<[1], [1], [0], [0], [0, 0, 1, 0], [], []>} : vector<4x256xf32>, vector<4x256xf32>, vector<4x4xf32> -> vector<4x4xf32>
    %c0_10 = arith.constant 0 : index
    %c0_11 = arith.constant 0 : index
    %c0_12 = arith.constant 0 : index
    %c0_13 = arith.constant 0 : index
    %c0_14 = arith.constant 0 : index
    %8 = vector.load %arg5[%c0_10, %c0_11, %c0_12, %c0_13, %c0_14] : memref<1x1x1x4x4xf32, #tpu.memory_space<vmem>>, vector<1x1x1x4x4xf32>
    %9 = vector.shape_cast %8 : vector<1x1x1x4x4xf32> to vector<4x4xf32>
    %10 = vector.shape_cast %7 : vector<4x4xf32> to vector<1x1x1x4x4xf32>
    tpu.vector_store %arg5[%c0_10, %c0_11, %c0_12, %c0_13, %c0_14], %10 {strides = array<i32>} : memref<1x1x1x4x4xf32, #tpu.memory_space<vmem>>, vector<1x1x1x4x4xf32>,
    return
  }
  func.func @transform_0(%arg0: i32, %arg1: i32, %arg2: i32) -> (i32, i32, i32, i32) {
    %c0_i32 = arith.constant 0 : i32
    %c0_i32_0 = arith.constant 0 : i32
    return %arg0, %arg1, %c0_i32, %arg2 : i32, i32, i32, i32
  }
  func.func @transform_1(%arg0: i32, %arg1: i32, %arg2: i32) -> (i32, i32, i32, i32, i32) {
    %c0_i32 = arith.constant 0 : i32
    %c0_i32_0 = arith.constant 0 : i32
    %c0_i32_1 = arith.constant 0 : i32
    return %arg0, %arg1, %arg2, %c0_i32, %c0_i32_0 : i32, i32, i32, i32, i32
  }
  func.func @transform_2(%arg0: i32, %arg1: i32, %arg2: i32) -> (i32, i32, i32, i32, i32) {
    %c0_i32 = arith.constant 0 : i32
    %c0_i32_0 = arith.constant 0 : i32
    %c0_i32_1 = arith.constant 0 : i32
    return %arg0, %arg1, %arg2, %c0_i32, %c0_i32_0 : i32, i32, i32, i32, i32
  }
}

module attributes {stable_mosaic.version = 11 : i64} {
  func.func @_whiten_kernel(%arg0: i32, %arg1: i32, %arg2: i32, %arg3: memref<1x1x4x256xf32, #tpu.memory_space<vmem>>, %arg4: memref<1x4x4xf32, #tpu.memory_space<vmem>>, %arg5: memref<1x4x1xf32, #tpu.memory_space<vmem>>, %arg6: memref<1x1x4x256xf32, #tpu.memory_space<vmem>>) attributes {dimension_semantics = [#tpu.dimension_semantics<parallel>, #tpu.dimension_semantics<parallel>, #tpu.dimension_semantics<parallel>], iteration_bounds = array<i64: 2, 1, 1>, scalar_prefetch = 0 : i64, scratch_operands = 0 : i64, tpu.core_type = #tpu.core_type<tc>, window_params = [{transform_indices = @transform_0, window_bounds = array<i64: 1, 1, 4, 256>}, {transform_indices = @transform_1, window_bounds = array<i64: 1, 4, 4>}, {transform_indices = @transform_2, window_bounds = array<i64: 1, 4, 1>}, {transform_indices = @transform_3, window_bounds = array<i64: 1, 1, 4, 256>}]} {
    %c0 = arith.constant 0 : index
    %c0_0 = arith.constant 0 : index
    %c0_1 = arith.constant 0 : index
    %0 = vector.load %arg4[%c0, %c0_0, %c0_1] : memref<1x4x4xf32, #tpu.memory_space<vmem>>, vector<1x4x4xf32>
    %1 = vector.shape_cast %0 : vector<1x4x4xf32> to vector<4x4xf32>
    %c0_2 = arith.constant 0 : index
    %c0_3 = arith.constant 0 : index
    %c0_4 = arith.constant 0 : index
    %c0_5 = arith.constant 0 : index
    %2 = vector.load %arg3[%c0_2, %c0_3, %c0_4, %c0_5] : memref<1x1x4x256xf32, #tpu.memory_space<vmem>>, vector<1x1x4x256xf32>
    %3 = vector.shape_cast %2 : vector<1x1x4x256xf32> to vector<4x256xf32>
    %cst = arith.constant dense<0.000000e+00> : vector<4x256xf32>
    %4 = tpu.matmul %1, %3, %cst {dimension_numbers = #tpu.dot_dimension_numbers<[1], [0], [0], [1], [0, 0, 1, 1], [], []>} : vector<4x4xf32>, vector<4x256xf32>, vector<4x256xf32> -> vector<4x256xf32>
    %c0_6 = arith.constant 0 : index
    %c0_7 = arith.constant 0 : index
    %c0_8 = arith.constant 0 : index
    %5 = vector.load %arg5[%c0_6, %c0_7, %c0_8] : memref<1x4x1xf32, #tpu.memory_space<vmem>>, vector<1x4x1xf32>
    %6 = vector.shape_cast %5 : vector<1x4x1xf32> to vector<4x1xf32>
    %7 = vector.broadcast %6 : vector<4x1xf32> to vector<4x256xf32>
    %8 = arith.addf %4, %7 : vector<4x256xf32>
    %c0_9 = arith.constant 0 : index
    %c0_10 = arith.constant 0 : index
    %c0_11 = arith.constant 0 : index
    %c0_12 = arith.constant 0 : index
    %9 = vector.load %arg6[%c0_9, %c0_10, %c0_11, %c0_12] : memref<1x1x4x256xf32, #tpu.memory_space<vmem>>, vector<1x1x4x256xf32>
    %10 = vector.shape_cast %9 : vector<1x1x4x256xf32> to vector<4x256xf32>
    %11 = vector.shape_cast %8 : vector<4x256xf32> to vector<1x1x4x256xf32>
    tpu.vector_store %arg6[%c0_9, %c0_10, %c0_11, %c0_12], %11 {strides = array<i32>} : memref<1x1x4x256xf32, #tpu.memory_space<vmem>>, vector<1x1x4x256xf32>,
    return
  }
  func.func @transform_0(%arg0: i32, %arg1: i32, %arg2: i32) -> (i32, i32, i32, i32) {
    %c0_i32 = arith.constant 0 : i32
    %c0_i32_0 = arith.constant 0 : i32
    return %arg0, %arg1, %c0_i32, %arg2 : i32, i32, i32, i32
  }
  func.func @transform_1(%arg0: i32, %arg1: i32, %arg2: i32) -> (i32, i32, i32) {
    %c0_i32 = arith.constant 0 : i32
    %c0_i32_0 = arith.constant 0 : i32
    %c0_i32_1 = arith.constant 0 : i32
    return %arg1, %c0_i32, %c0_i32_0 : i32, i32, i32
  }
  func.func @transform_2(%arg0: i32, %arg1: i32, %arg2: i32) -> (i32, i32, i32) {
    %c0_i32 = arith.constant 0 : i32
    %c0_i32_0 = arith.constant 0 : i32
    %c0_i32_1 = arith.constant 0 : i32
    return %arg1, %c0_i32, %c0_i32_0 : i32, i32, i32
  }
  func.func @transform_3(%arg0: i32, %arg1: i32, %arg2: i32) -> (i32, i32, i32, i32) {
    %c0_i32 = arith.constant 0 : i32
    %c0_i32_0 = arith.constant 0 : i32
    return %arg0, %arg1, %c0_i32, %arg2 : i32, i32, i32, i32
  }
}

</mosaic_0001>

<llo_original>
// kernel: sub.57
$region0: #{sub.57}
  #allocation0 [shape = 's32[1]{0}', space=sflag, size = 0x4, scoped, tag = 'scoped memory for sub.57']
  %s0 = inlined_call_operand.vmem [shape: f32[1,4,1], index: 0, kind: input, shape index: {}]
  %s1 = inlined_call_operand.vmem [shape: f32[1,4,1], index: 1, kind: input, shape index: {}]
  %s2 = inlined_call_operand.vmem [shape: f32[1,4,1], index: 2, kind: output, shape index: {}]
  %v3 = vld [vmem:[%s0] sm:$0xf]
  %v4 = vld [vmem:[%s1] sm:$0xf]
  %5 = xla_tuple %v3, %v4
  %6 = xla_tuple %5
  %v7 = vsub.f32 %v3, %v4
  %8 = xla_tuple %v7
  %9 = vst [vmem:[%s2] sm:$0xf] %v7

// kernel: iter_norm_forward.2
$region0: #{iter_norm_forward.2}
  #allocation0 [shape = 'u32[]', space=smem, size = 0x4, offset = 0x4, fixed_abs, tag = 'smem constant byte address 0x4 - core index']
  #allocation1 [shape = 'u32[144,128]{1,0:T(1,128)}', space=vmem, size = 0x12000, scoped, tag = 'internal scratch']
  %s0 = inlined_call_operand.vmem [shape: f32[2,1,4,256], index: 0, kind: input, shape index: {}]
  %s1 = inlined_call_operand.vmem [shape: f32[2,1,1,1,4], index: 1, kind: output, shape index: {0}]
  %s2 = inlined_call_operand.vmem [shape: f32[2,1,1,4,4], index: 2, kind: output, shape index: {1}]
  %3 = xla_tuple %s1, %s2
  %s4 = sld [smem:[#allocation0]]
  $region45: #{iter_norm_forward.2} parent=0
    _
  %s6 = ssub.s32 1, %s4
  %s7 = scalar_select 0, %s6, %s4
  loop: start=0, step=1, limit=4
  $region2: #{iter_norm_forward.2} parent=0 // loop_pre_header
    _
  $region3: #{iter_norm_forward.2} parent=0 // loop_header
    %s9 = sphi 0, %s13
    %p10 = scmp.ge.s32.totalorder %s9, 4
    %s16 = sphi 0, %s35
    %s17 = sphi 0, %s31
    %s18 = sphi 0, %s27
    %s19 = sphi 0, %s16
    %s20 = sphi 0, %s17
    %s21 = sphi 0, %s18
    %s22 = sphi 0, %s19
    %s23 = sphi 0, %s20
    %s24 = sphi 0, %s21
    %s42 = sphi 0, %s44
    %s45 = sphi 0, %s42
    %s46 = sphi 0, %s45
    %s62 = sphi 0, %s46
    %s72 = sphi 0, %s74
    %s75 = sphi 0, %s72
    %s76 = sphi 0, %s75
    %s92 = sphi 0, %s76
    %s102 = sphi 0, %s104
    %s105 = sphi 0, %s102
    %s106 = sphi 0, %s105
    %s122 = sphi 0, %s106
  $region4: #{iter_norm_forward.2} parent=0 // loop_header_branch
    %12 = sbr.rel (%p10) target = $region8
  $region5: #{iter_norm_forward.2} parent=0 // loop_body
    %s14 = ssub.s32 %s9, 1
    %s15 = ssub.s32 %s9, 2
    %s25 = sadd.s32 1, %s18
    %p26 = scmp.ge.s32.totalorder %s25, 1
    %s27 = scalar_select %p26, 0, %s25
    %s28 = sadd.s32 1, %s17
    %s29 = scalar_select %p26, %s28, %s17
    %p30 = scmp.ge.s32.totalorder %s29, 1
    %s31 = scalar_select %p30, 0, %s29
    %s32 = sadd.s32 1, %s16
    %s33 = scalar_select %p30, %s32, %s16
    %p34 = scmp.ge.s32.totalorder %s33, 2
    %s35 = scalar_select %p34, 0, %s33
    %s36 = ssub.s32 %s16, %s35
    %s37 = ssub.s32 %s17, %s31
    %s38 = sor.u32 %s36, %s37
    %s39 = ssub.s32 %s18, %s27
    %s40 = sor.u32 %s38, %s39
    %p41 = scmp.eq.s32.totalorder %s40, 0
    %s43 = sadd.s32 %s42, 1
    %s44 = scalar_select %p41, %s42, %s43
    %p47 = pneg %p41
    %p48 = scmp.eq.s32.totalorder %s9, 1
    %p49 = por %p47, %p48
    %p50 = scmp.ne.s32.totalorder %s42, %s45
    %p51 = scmp.eq.s32.totalorder %s9, 0
    %p52 = por %p50, %p51
    %p53 = scmp.ne.s32.totalorder %s42, %s45
    %p54 = scmp.eq.s32.totalorder %s14, 1
    %p55 = por %p53, %p54
    %p56 = scmp.ne.s32.totalorder %s45, %s46
    %p57 = scmp.eq.s32.totalorder %s14, 0
    %p58 = por %p56, %p57
    %p59 = scmp.ne.s32.totalorder %s45, %s46
    %p60 = scmp.eq.s32.totalorder %s15, 1
    %p61 = por %p59, %p60
    %p63 = scmp.ne.s32.totalorder %s46, %s62
    %p64 = scmp.eq.s32.totalorder %s15, 0
    %p65 = por %p63, %p64
    %s66 = ssub.s32 %s16, %s35
    %s67 = ssub.s32 %s17, %s31
    %s68 = sor.u32 %s66, %s67
    %s69 = ssub.s32 %s18, %s27
    %s70 = sor.u32 %s68, %s69
    %p71 = scmp.eq.s32.totalorder %s70, 0
    %s73 = sadd.s32 %s72, 1
    %s74 = scalar_select %p71, %s72, %s73
    %p77 = pneg %p71
    %p78 = scmp.eq.s32.totalorder %s9, 1
    %p79 = por %p77, %p78
    %p80 = scmp.ne.s32.totalorder %s72, %s75
    %p81 = scmp.eq.s32.totalorder %s9, 0
    %p82 = por %p80, %p81
    %p83 = scmp.ne.s32.totalorder %s72, %s75
    %p84 = scmp.eq.s32.totalorder %s14, 1
    %p85 = por %p83, %p84
    %p86 = scmp.ne.s32.totalorder %s75, %s76
    %p87 = scmp.eq.s32.totalorder %s14, 0
    %p88 = por %p86, %p87
    %p89 = scmp.ne.s32.totalorder %s75, %s76
    %p90 = scmp.eq.s32.totalorder %s15, 1
    %p91 = por %p89, %p90
    %p93 = scmp.ne.s32.totalorder %s76, %s92
    %p94 = scmp.eq.s32.totalorder %s15, 0
    %p95 = por %p93, %p94
    %s96 = ssub.s32 %s16, %s35
    %s97 = ssub.s32 %s17, %s31
    %s98 = sor.u32 %s96, %s97
    %s99 = ssub.s32 %s18, %s27
    %s100 = sor.u32 %s98, %s99
    %p101 = scmp.eq.s32.totalorder %s100, 0
    %s103 = sadd.s32 %s102, 1
    %s104 = scalar_select %p101, %s102, %s103
    %p107 = pneg %p101
    %p108 = scmp.eq.s32.totalorder %s9, 1
    %p109 = por %p107, %p108
    %p110 = scmp.ne.s32.totalorder %s102, %s105
    %p111 = scmp.eq.s32.totalorder %s9, 0
    %p112 = por %p110, %p111
    %p113 = scmp.ne.s32.totalorder %s102, %s105
    %p114 = scmp.eq.s32.totalorder %s14, 1
    %p115 = por %p113, %p114
    %p116 = scmp.ne.s32.totalorder %s105, %s106
    %p117 = scmp.eq.s32.totalorder %s14, 0
    %p118 = por %p116, %p117
    %p119 = scmp.ne.s32.totalorder %s105, %s106
    %p120 = scmp.eq.s32.totalorder %s15, 1
    %p121 = por %p119, %p120
    %p123 = scmp.ne.s32.totalorder %s106, %s122
    %p124 = scmp.eq.s32.totalorder %s15, 0
    %p125 = por %p123, %p124
    %p126 = scmp.le.s32.totalorder 1, %s9
    %p127 = scmp.lt.s32.totalorder %s9, 3
    %p128 = pnand %p126, %p127
    %p129 = pneg %p128
    // Predicated region
    $region9: #{iter_norm_forward.2} parent=5 // pred_check
      _
    $region10: #{iter_norm_forward.2} parent=5 // pred_check_branch
      %131 = sbr.rel (%p128) target = $region12
    $region11: #{iter_norm_forward.2} parent=5 // pred_region
      %s132 = ssub.s32 %s9, 1
    $region12: #{iter_norm_forward.2} parent=5 // pred_fallthru
      _
    %p133 = scmp.lt.s32.totalorder %s9, 2
    // Predicated region
    $region13: #{iter_norm_forward.2} parent=5 // pred_check
      %p134 = pneg %p133
    $region14: #{iter_norm_forward.2} parent=5 // pred_check_branch
      %136 = sbr.rel (%p134) target = $region16
    $region15: #{iter_norm_forward.2} parent=5 // pred_region
      // Predicated region
      $region17: #{iter_norm_forward.2} parent=15 // pred_check
        %p137 = pneg %p52
      $region18: #{iter_norm_forward.2} parent=15 // pred_check_branch
        %139 = sbr.rel (%p137) target = $region20
      $region19: #{iter_norm_forward.2} parent=15 // pred_region
        %s140 = smul.u32 2, %s18
        %p141 = scmp.lt.s32.totalorder %s16, 1
        %s142 = scalar_select %p141, %s16, 1
        %p143 = scmp.lt.s32.totalorder %s17, 0
        %s144 = scalar_select %p143, %s17, 0
        %p145 = scmp.lt.s32.totalorder %s140, 1
        %s146 = scalar_select %p145, %s140, 1
        %s147 = smul.addr %s144, 2
        %s148 = sadd.s32 %s146, %s147
        %s149 = smul.addr %s142, 2
        %s150 = sadd.s32 %s148, %s149
        %s151 = smul.addr %s150, 4
        %s152 = scalar_lea.vmem %s0, %s151
        %s153 = smul.u32 2, %s18
      $region20: #{iter_norm_forward.2} parent=15 // pred_fallthru
        _
    $region16: #{iter_norm_forward.2} parent=5 // pred_fallthru
      _
    %p154 = scmp.le.s32.totalorder 1, %s9
    %p155 = scmp.lt.s32.totalorder %s9, 3
    %p156 = pnand %p154, %p155
    %p157 = pneg %p156
    // Predicated region
    $region21: #{iter_norm_forward.2} parent=5 // pred_check
      _
    $region22: #{iter_norm_forward.2} parent=5 // pred_check_branch
      %159 = sbr.rel (%p156) target = $region24
    $region23: #{iter_norm_forward.2} parent=5 // pred_region
      %s160 = ssub.s32 %s9, 1
      %s161 = smul.u32 2, %s21
      %p162 = scmp.lt.s32.totalorder %s19, 1
      %s163 = scalar_select %p162, %s19, 1
      %p164 = scmp.lt.s32.totalorder %s20, 0
      %s165 = scalar_select %p164, %s20, 0
      %p166 = scmp.lt.s32.totalorder %s161, 1
      %s167 = scalar_select %p166, %s161, 1
      %s168 = smul.addr %s165, 2
      %s169 = sadd.s32 %s167, %s168
      %s170 = smul.addr %s163, 2
      %s171 = sadd.s32 %s169, %s170
      %s172 = smul.addr %s171, 4
      %s173 = scalar_lea.vmem %s0, %s172
      %p174 = pneg %p58
      %p175 = pneg %p55
      %p176 = pneg %p88
      %p177 = pneg %p85
      %p178 = scmp.lt.s32.totalorder %s19, 1
      %s179 = scalar_select %p178, %s19, 1
      %p180 = scmp.lt.s32.totalorder %s20, 0
      %s181 = scalar_select %p180, %s20, 0
      %p182 = scmp.lt.s32.totalorder %s21, 0
      %s183 = scalar_select %p182, %s21, 0
      %s184 = sadd.s32 %s183, %s181
      %s185 = sadd.s32 %s184, %s179
      %s186 = scalar_lea.vmem %s1, %s185
      %p187 = pneg %p118
      %p188 = pneg %p115
      %p189 = scmp.lt.s32.totalorder %s19, 1
      %s190 = scalar_select %p189, %s19, 1
      %p191 = scmp.lt.s32.totalorder %s20, 0
      %s192 = scalar_select %p191, %s20, 0
      %p193 = scmp.lt.s32.totalorder %s21, 0
      %s194 = scalar_select %p193, %s21, 0
      %s195 = sadd.s32 %s194, %s192
      %s196 = sadd.s32 %s195, %s190
      %s197 = smul.addr %s196, 4
      %s198 = scalar_lea.vmem %s2, %s197
      %s199 = smul.u32 2, %s21
      %p200 = scmp.lt.s32.totalorder %s19, 1
      %s201 = scalar_select %p200, %s19, 1
      %p202 = scmp.lt.s32.totalorder %s20, 0
      %s203 = scalar_select %p202, %s20, 0
      %p204 = scmp.lt.s32.totalorder %s199, 1
      %s205 = scalar_select %p204, %s199, 1
      %s206 = smul.addr %s203, 2
      %s207 = sadd.s32 %s205, %s206
      %s208 = smul.addr %s201, 2
      %s209 = sadd.s32 %s207, %s208
      %s210 = smul.addr %s209, 4
      %s211 = scalar_lea.vmem %s0, %s210
      %s212 = smul.u32 2, %s21
      %p213 = scmp.lt.s32.totalorder %s19, 1
      %s214 = scalar_select %p213, %s19, 1
      %p215 = scmp.lt.s32.totalorder %s20, 0
      %s216 = scalar_select %p215, %s20, 0
      %p217 = scmp.lt.s32.totalorder %s21, 0
      %s218 = scalar_select %p217, %s21, 0
      %s219 = sadd.s32 %s218, %s216
      %s220 = sadd.s32 %s219, %s214
      %s221 = scalar_lea.vmem %s1, %s220
      %p222 = scmp.lt.s32.totalorder %s19, 1
      %s223 = scalar_select %p222, %s19, 1
      %p224 = scmp.lt.s32.totalorder %s20, 0
      %s225 = scalar_select %p224, %s20, 0
      %p226 = scmp.lt.s32.totalorder %s21, 0
      %s227 = scalar_select %p226, %s21, 0
      %s228 = sadd.s32 %s227, %s225
      %s229 = sadd.s32 %s228, %s223
      %s230 = smul.addr %s229, 4
      %s231 = scalar_lea.vmem %s2, %s230
      %v232 = vld [vmem:[%s211] sm:$0xff]
      %v234 = vcombine.high %v232, %v232
      %236 = vmatprep.subr.mxu0 %v234
      %237 = vmatpush1.xpose.msra.mxu0 %v232
      %238 = vmatprep.subr.mxu0 0.0
      %239 = vmatpush1.xpose.msra.mxu0 0.0
      %240 = vmatprep.subr.mxu0 0.0
      %241 = vmatpush1.xpose.msra.mxu0 0.0
      %242 = vmatprep.subr.mxu0 0.0
      %243 = vmatpush1.xpose.msra.mxu0 0.0
      %244 = vmatprep.subr.mxu0 0.0
      %245 = vmatpush1.xpose.msra.mxu0 0.0
      %246 = vmatprep.subr.mxu0 0.0
      %247 = vmatpush1.xpose.msra.mxu0 0.0
      %248 = vmatprep.subr.mxu0 0.0
      %249 = vmatpush1.xpose.msra.mxu0 0.0
      %250 = vmatprep.subr.mxu0 0.0
      %251 = vmatpush1.xpose.msra.mxu0 0.0
      %252 = vmatprep.subr.mxu0 0.0
      %253 = vmatpush1.xpose.msra.mxu0 0.0
      %254 = vmatprep.subr.mxu0 0.0
      %255 = vmatpush1.xpose.msra.mxu0 0.0
      %256 = vmatprep.subr.mxu0 0.0
      %257 = vmatpush1.xpose.msra.mxu0 0.0
      %258 = vmatprep.subr.mxu0 0.0
      %259 = vmatpush1.xpose.msra.mxu0 0.0
      %260 = vmatprep.subr.mxu0 0.0
      %261 = vmatpush1.xpose.msra.mxu0 0.0
      %262 = vmatprep.subr.mxu0 0.0
      %263 = vmatpush1.xpose.msra.mxu0 0.0
      %264 = vmatprep.subr.mxu0 0.0
      %265 = vmatpush1.xpose.msra.mxu0 0.0
      %266 = vmatprep.subr.mxu0 0.0
      %267 = vmatpush1.xpose.msra.mxu0 0.0
      %268 = vmatprep.subr.mxu0 0.0
      %269 = vmatpush1.xpose.msra.mxu0 0.0
      %270 = vmatprep.subr.mxu0 0.0
      %271 = vmatpush1.xpose.msra.mxu0 0.0
      %272 = vmatprep.subr.mxu0 0.0
      %273 = vmatpush1.xpose.msra.mxu0 0.0
      %274 = vmatprep.subr.mxu0 0.0
      %275 = vmatpush1.xpose.msra.mxu0 0.0
      %276 = vmatprep.subr.mxu0 0.0
      %277 = vmatpush1.xpose.msra.mxu0 0.0
      %278 = vmatprep.subr.mxu0 0.0
      %279 = vmatpush1.xpose.msra.mxu0 0.0
      %280 = vmatprep.subr.mxu0 0.0
      %281 = vmatpush1.xpose.msra.mxu0 0.0
      %282 = vmatprep.subr.mxu0 0.0
      %283 = vmatpush1.xpose.msra.mxu0 0.0
      %284 = vmatprep.subr.mxu0 0.0
      %285 = vmatpush1.xpose.msra.mxu0 0.0
      %286 = vmatprep.subr.mxu0 0.0
      %287 = vmatpush1.xpose.msra.mxu0 0.0
      %288 = vmatprep.subr.mxu0 0.0
      %289 = vmatpush1.xpose.msra.mxu0 0.0
      %290 = vmatprep.subr.mxu0 0.0
      %291 = vmatpush1.xpose.msra.mxu0 0.0
      %292 = vmatprep.subr.mxu0 0.0
      %293 = vmatpush1.xpose.msra.mxu0 0.0
      %294 = vmatprep.subr.mxu0 0.0
      %295 = vmatpush1.xpose.msra.mxu0 0.0
      %296 = vmatprep.subr.mxu0 0.0
      %297 = vmatpush1.xpose.msra.mxu0 0.0
      %298 = vmatprep.subr.mxu0 0.0
      %299 = vmatpush1.xpose.msra.mxu0 0.0
      %300 = vmatprep.mubr.f32.mxu0 1.0
      %301 = vmatmul.mubr.f32.gmra.mrb[0].mxu0 1.0
      %v302 = vpop.f32.mrb[0].mxu0
      %v303 = vadd.f32 0.0, %v302
      %v304 = vpop.f32.mrb[0].mxu0
      %305 = vdwg.mxu0
      %vm306 = vcmask 24576
      %307 = vst.msk [vmem:[%s221] sm:$0x1] %vm306, %v303
      %308 = vmatprep.subr.mxu0 %v234
      %309 = vmatpush1.xpose.msra.mxu0 %v232
      %310 = vmatprep.subr.mxu0 0.0
      %311 = vmatpush1.xpose.msra.mxu0 0.0
      %312 = vmatprep.subr.mxu0 0.0
      %313 = vmatpush1.xpose.msra.mxu0 0.0
      %314 = vmatprep.subr.mxu0 0.0
      %315 = vmatpush1.xpose.msra.mxu0 0.0
      %316 = vmatprep.subr.mxu0 0.0
      %317 = vmatpush1.xpose.msra.mxu0 0.0
      %318 = vmatprep.subr.mxu0 0.0
      %319 = vmatpush1.xpose.msra.mxu0 0.0
      %320 = vmatprep.subr.mxu0 0.0
      %321 = vmatpush1.xpose.msra.mxu0 0.0
      %322 = vmatprep.subr.mxu0 0.0
      %323 = vmatpush1.xpose.msra.mxu0 0.0
      %324 = vmatprep.subr.mxu0 0.0
      %325 = vmatpush1.xpose.msra.mxu0 0.0
      %326 = vmatprep.subr.mxu0 0.0
      %327 = vmatpush1.xpose.msra.mxu0 0.0
      %328 = vmatprep.subr.mxu0 0.0
      %329 = vmatpush1.xpose.msra.mxu0 0.0
      %330 = vmatprep.subr.mxu0 0.0
      %331 = vmatpush1.xpose.msra.mxu0 0.0
      %332 = vmatprep.subr.mxu0 0.0
      %333 = vmatpush1.xpose.msra.mxu0 0.0
      %334 = vmatprep.subr.mxu0 0.0
      %335 = vmatpush1.xpose.msra.mxu0 0.0
      %336 = vmatprep.subr.mxu0 0.0
      %337 = vmatpush1.xpose.msra.mxu0 0.0
      %338 = vmatprep.subr.mxu0 0.0
      %339 = vmatpush1.xpose.msra.mxu0 0.0
      %340 = vmatprep.subr.mxu0 0.0
      %341 = vmatpush1.xpose.msra.mxu0 0.0
      %342 = vmatprep.subr.mxu0 0.0
      %343 = vmatpush1.xpose.msra.mxu0 0.0
      %344 = vmatprep.subr.mxu0 0.0
      %345 = vmatpush1.xpose.msra.mxu0 0.0
      %346 = vmatprep.subr.mxu0 0.0
      %347 = vmatpush1.xpose.msra.mxu0 0.0
      %348 = vmatprep.subr.mxu0 0.0
      %349 = vmatpush1.xpose.msra.mxu0 0.0
      %350 = vmatprep.subr.mxu0 0.0
      %351 = vmatpush1.xpose.msra.mxu0 0.0
      %352 = vmatprep.subr.mxu0 0.0
      %353 = vmatpush1.xpose.msra.mxu0 0.0
      %354 = vmatprep.subr.mxu0 0.0
      %355 = vmatpush1.xpose.msra.mxu0 0.0
      %356 = vmatprep.subr.mxu0 0.0
      %357 = vmatpush1.xpose.msra.mxu0 0.0
      %358 = vmatprep.subr.mxu0 0.0
      %359 = vmatpush1.xpose.msra.mxu0 0.0
      %360 = vmatprep.subr.mxu0 0.0
      %361 = vmatpush1.xpose.msra.mxu0 0.0
      %362 = vmatprep.subr.mxu0 0.0
      %363 = vmatpush1.xpose.msra.mxu0 0.0
      %364 = vmatprep.subr.mxu0 0.0
      %365 = vmatpush1.xpose.msra.mxu0 0.0
      %366 = vmatprep.subr.mxu0 0.0
      %367 = vmatpush1.xpose.msra.mxu0 0.0
      %368 = vmatprep.subr.mxu0 0.0
      %369 = vmatpush1.xpose.msra.mxu0 0.0
      %370 = vmatprep.subr.mxu0 0.0
      %371 = vmatpush1.xpose.msra.mxu0 0.0
      %372 = vmatprep.mubr.f32.mxu0 %v234
      %373 = vmatmul.mubr.f32.gmra.mrb[0].mxu0 %v232
      %v374 = vpop.f32.mrb[0].mxu0
      %v375 = vadd.f32 0.0, %v374
      %v376 = vpop.f32.mrb[0].mxu0
      %377 = vdwg.mxu0
      %vm378 = vcmask 27648
      %379 = vst.msk [vmem:[%s231] sm:$0xf] %vm378, %v375
      %p380 = scmp.lt.s32.totalorder %s19, 1
      %s381 = scalar_select %p380, %s19, 1
      %p382 = scmp.lt.s32.totalorder %s20, 0
      %s383 = scalar_select %p382, %s20, 0
      %p384 = scmp.lt.s32.totalorder %s21, 0
      %s385 = scalar_select %p384, %s21, 0
      %s386 = sadd.s32 %s385, %s383
      %s387 = sadd.s32 %s386, %s381
      %s388 = scalar_lea.vmem %s1, %s387
      %p389 = scmp.lt.s32.totalorder %s19, 1
      %s390 = scalar_select %p389, %s19, 1
      %p391 = scmp.lt.s32.totalorder %s20, 0
      %s392 = scalar_select %p391, %s20, 0
      %p393 = scmp.lt.s32.totalorder %s21, 0
      %s394 = scalar_select %p393, %s21, 0
      %s395 = sadd.s32 %s394, %s392
      %s396 = sadd.s32 %s395, %s390
      %s397 = smul.addr %s396, 4
      %s398 = scalar_lea.vmem %s2, %s397
      // Predicated region
      $region25: #{iter_norm_forward.2} parent=23 // pred_check
        %p399 = pneg %p85
      $region26: #{iter_norm_forward.2} parent=23 // pred_check_branch
        %401 = sbr.rel (%p399) target = $region28
      $region27: #{iter_norm_forward.2} parent=23 // pred_region
        _
      $region28: #{iter_norm_forward.2} parent=23 // pred_fallthru
        _
      // Predicated region
      $region29: #{iter_norm_forward.2} parent=23 // pred_check
        %p402 = pneg %p115
      $region30: #{iter_norm_forward.2} parent=23 // pred_check_branch
        %404 = sbr.rel (%p402) target = $region32
      $region31: #{iter_norm_forward.2} parent=23 // pred_region
        _
      $region32: #{iter_norm_forward.2} parent=23 // pred_fallthru
        _
    $region24: #{iter_norm_forward.2} parent=5 // pred_fallthru
      _
    %p405 = scmp.le.s32.totalorder 2, %s9
    // Predicated region
    $region33: #{iter_norm_forward.2} parent=5 // pred_check
      %p406 = pneg %p405
    $region34: #{iter_norm_forward.2} parent=5 // pred_check_branch
      %408 = sbr.rel (%p406) target = $region36
    $region35: #{iter_norm_forward.2} parent=5 // pred_region
      %s409 = ssub.s32 %s9, 2
      // Predicated region
      $region37: #{iter_norm_forward.2} parent=35 // pred_check
        %p410 = pneg %p91
      $region38: #{iter_norm_forward.2} parent=35 // pred_check_branch
        %412 = sbr.rel (%p410) target = $region40
      $region39: #{iter_norm_forward.2} parent=35 // pred_region
        %p413 = scmp.lt.s32.totalorder %s22, 1
        %s414 = scalar_select %p413, %s22, 1
        %p415 = scmp.lt.s32.totalorder %s23, 0
        %s416 = scalar_select %p415, %s23, 0
        %p417 = scmp.lt.s32.totalorder %s24, 0
        %s418 = scalar_select %p417, %s24, 0
        %s419 = sadd.s32 %s418, %s416
        %s420 = sadd.s32 %s419, %s414
        %s421 = scalar_lea.vmem %s1, %s420
      $region40: #{iter_norm_forward.2} parent=35 // pred_fallthru
        _
      // Predicated region
      $region41: #{iter_norm_forward.2} parent=35 // pred_check
        %p422 = pneg %p121
      $region42: #{iter_norm_forward.2} parent=35 // pred_check_branch
        %424 = sbr.rel (%p422) target = $region44
      $region43: #{iter_norm_forward.2} parent=35 // pred_region
        %p425 = scmp.lt.s32.totalorder %s22, 1
        %s426 = scalar_select %p425, %s22, 1
        %p427 = scmp.lt.s32.totalorder %s23, 0
        %s428 = scalar_select %p427, %s23, 0
        %p429 = scmp.lt.s32.totalorder %s24, 0
        %s430 = scalar_select %p429, %s24, 0
        %s431 = sadd.s32 %s430, %s428
        %s432 = sadd.s32 %s431, %s426
        %s433 = smul.addr %s432, 4
        %s434 = scalar_lea.vmem %s2, %s433
      $region44: #{iter_norm_forward.2} parent=35 // pred_fallthru
        _
    $region36: #{iter_norm_forward.2} parent=5 // pred_fallthru
      _
  $region6: #{iter_norm_forward.2} parent=0 // loop_footer
    %s13 = sadd.s32 1, %s9
  $region7: #{iter_norm_forward.2} parent=0 // loop_footer_branch
    %8 = sbr.rel target = $region3
  $region8: #{iter_norm_forward.2} parent=0 // loop_exit
    _

// kernel: iter_norm_forward.3
$region0: #{iter_norm_forward.3}
  #allocation0 [shape = 'u32[]', space=smem, size = 0x4, offset = 0x4, fixed_abs, tag = 'smem constant byte address 0x4 - core index']
  #allocation1 [shape = 'u32[144,128]{1,0:T(1,128)}', space=vmem, size = 0x12000, scoped, tag = 'internal scratch']
  %s0 = inlined_call_operand.vmem [shape: f32[2,1,4,256], index: 0, kind: input, shape index: {}]
  %s1 = inlined_call_operand.vmem [shape: f32[1,4,4], index: 1, kind: input, shape index: {}]
  %s2 = inlined_call_operand.vmem [shape: f32[1,4,1], index: 2, kind: input, shape index: {}]
  %s3 = inlined_call_operand.vmem [shape: f32[2,1,4,256], index: 3, kind: output, shape index: {}]
  %s4 = sld [smem:[#allocation0]]
  $region45: #{iter_norm_forward.3} parent=0
    _
  %s6 = ssub.s32 1, %s4
  %s7 = scalar_select 0, %s6, %s4
  loop: start=0, step=1, limit=4
  $region2: #{iter_norm_forward.3} parent=0 // loop_pre_header
    _
  $region3: #{iter_norm_forward.3} parent=0 // loop_header
    %s9 = sphi 0, %s13
    %p10 = scmp.ge.s32.totalorder %s9, 4
    %s16 = sphi 0, %s35
    %s17 = sphi 0, %s31
    %s18 = sphi 0, %s27
    %s19 = sphi 0, %s16
    %s20 = sphi 0, %s17
    %s21 = sphi 0, %s18
    %s22 = sphi 0, %s19
    %s23 = sphi 0, %s20
    %s24 = sphi 0, %s21
    %s42 = sphi 0, %s44
    %s45 = sphi 0, %s42
    %s46 = sphi 0, %s45
    %s62 = sphi 0, %s46
    %s68 = sphi 0, %s70
    %s71 = sphi 0, %s68
    %s72 = sphi 0, %s71
    %s88 = sphi 0, %s72
    %s94 = sphi 0, %s96
    %s97 = sphi 0, %s94
    %s98 = sphi 0, %s97
    %s114 = sphi 0, %s98
    %s124 = sphi 0, %s126
    %s127 = sphi 0, %s124
    %s128 = sphi 0, %s127
    %s144 = sphi 0, %s128
  $region4: #{iter_norm_forward.3} parent=0 // loop_header_branch
    %12 = sbr.rel (%p10) target = $region8
  $region5: #{iter_norm_forward.3} parent=0 // loop_body
    %s14 = ssub.s32 %s9, 1
    %s15 = ssub.s32 %s9, 2
    %s25 = sadd.s32 1, %s18
    %p26 = scmp.ge.s32.totalorder %s25, 1
    %s27 = scalar_select %p26, 0, %s25
    %s28 = sadd.s32 1, %s17
    %s29 = scalar_select %p26, %s28, %s17
    %p30 = scmp.ge.s32.totalorder %s29, 1
    %s31 = scalar_select %p30, 0, %s29
    %s32 = sadd.s32 1, %s16
    %s33 = scalar_select %p30, %s32, %s16
    %p34 = scmp.ge.s32.totalorder %s33, 2
    %s35 = scalar_select %p34, 0, %s33
    %s36 = ssub.s32 %s16, %s35
    %s37 = ssub.s32 %s17, %s31
    %s38 = sor.u32 %s36, %s37
    %s39 = ssub.s32 %s18, %s27
    %s40 = sor.u32 %s38, %s39
    %p41 = scmp.eq.s32.totalorder %s40, 0
    %s43 = sadd.s32 %s42, 1
    %s44 = scalar_select %p41, %s42, %s43
    %p47 = pneg %p41
    %p48 = scmp.eq.s32.totalorder %s9, 1
    %p49 = por %p47, %p48
    %p50 = scmp.ne.s32.totalorder %s42, %s45
    %p51 = scmp.eq.s32.totalorder %s9, 0
    %p52 = por %p50, %p51
    %p53 = scmp.ne.s32.totalorder %s42, %s45
    %p54 = scmp.eq.s32.totalorder %s14, 1
    %p55 = por %p53, %p54
    %p56 = scmp.ne.s32.totalorder %s45, %s46
    %p57 = scmp.eq.s32.totalorder %s14, 0
    %p58 = por %p56, %p57
    %p59 = scmp.ne.s32.totalorder %s45, %s46
    %p60 = scmp.eq.s32.totalorder %s15, 1
    %p61 = por %p59, %p60
    %p63 = scmp.ne.s32.totalorder %s46, %s62
    %p64 = scmp.eq.s32.totalorder %s15, 0
    %p65 = por %p63, %p64
    %s66 = ssub.s32 %s17, %s31
    %p67 = scmp.eq.s32.totalorder %s66, 0
    %s69 = sadd.s32 %s68, 1
    %s70 = scalar_select %p67, %s68, %s69
    %p73 = pneg %p67
    %p74 = scmp.eq.s32.totalorder %s9, 1
    %p75 = por %p73, %p74
    %p76 = scmp.ne.s32.totalorder %s68, %s71
    %p77 = scmp.eq.s32.totalorder %s9, 0
    %p78 = por %p76, %p77
    %p79 = scmp.ne.s32.totalorder %s68, %s71
    %p80 = scmp.eq.s32.totalorder %s14, 1
    %p81 = por %p79, %p80
    %p82 = scmp.ne.s32.totalorder %s71, %s72
    %p83 = scmp.eq.s32.totalorder %s14, 0
    %p84 = por %p82, %p83
    %p85 = scmp.ne.s32.totalorder %s71, %s72
    %p86 = scmp.eq.s32.totalorder %s15, 1
    %p87 = por %p85, %p86
    %p89 = scmp.ne.s32.totalorder %s72, %s88
    %p90 = scmp.eq.s32.totalorder %s15, 0
    %p91 = por %p89, %p90
    %s92 = ssub.s32 %s17, %s31
    %p93 = scmp.eq.s32.totalorder %s92, 0
    %s95 = sadd.s32 %s94, 1
    %s96 = scalar_select %p93, %s94, %s95
    %p99 = pneg %p93
    %p100 = scmp.eq.s32.totalorder %s9, 1
    %p101 = por %p99, %p100
    %p102 = scmp.ne.s32.totalorder %s94, %s97
    %p103 = scmp.eq.s32.totalorder %s9, 0
    %p104 = por %p102, %p103
    %p105 = scmp.ne.s32.totalorder %s94, %s97
    %p106 = scmp.eq.s32.totalorder %s14, 1
    %p107 = por %p105, %p106
    %p108 = scmp.ne.s32.totalorder %s97, %s98
    %p109 = scmp.eq.s32.totalorder %s14, 0
    %p110 = por %p108, %p109
    %p111 = scmp.ne.s32.totalorder %s97, %s98
    %p112 = scmp.eq.s32.totalorder %s15, 1
    %p113 = por %p111, %p112
    %p115 = scmp.ne.s32.totalorder %s98, %s114
    %p116 = scmp.eq.s32.totalorder %s15, 0
    %p117 = por %p115, %p116
    %s118 = ssub.s32 %s16, %s35
    %s119 = ssub.s32 %s17, %s31
    %s120 = sor.u32 %s118, %s119
    %s121 = ssub.s32 %s18, %s27
    %s122 = sor.u32 %s120, %s121
    %p123 = scmp.eq.s32.totalorder %s122, 0
    %s125 = sadd.s32 %s124, 1
    %s126 = scalar_select %p123, %s124, %s125
    %p129 = pneg %p123
    %p130 = scmp.eq.s32.totalorder %s9, 1
    %p131 = por %p129, %p130
    %p132 = scmp.ne.s32.totalorder %s124, %s127
    %p133 = scmp.eq.s32.totalorder %s9, 0
    %p134 = por %p132, %p133
    %p135 = scmp.ne.s32.totalorder %s124, %s127
    %p136 = scmp.eq.s32.totalorder %s14, 1
    %p137 = por %p135, %p136
    %p138 = scmp.ne.s32.totalorder %s127, %s128
    %p139 = scmp.eq.s32.totalorder %s14, 0
    %p140 = por %p138, %p139
    %p141 = scmp.ne.s32.totalorder %s127, %s128
    %p142 = scmp.eq.s32.totalorder %s15, 1
    %p143 = por %p141, %p142
    %p145 = scmp.ne.s32.totalorder %s128, %s144
    %p146 = scmp.eq.s32.totalorder %s15, 0
    %p147 = por %p145, %p146
    %p148 = scmp.le.s32.totalorder 1, %s9
    %p149 = scmp.lt.s32.totalorder %s9, 3
    %p150 = pnand %p148, %p149
    %p151 = pneg %p150
    // Predicated region
    $region9: #{iter_norm_forward.3} parent=5 // pred_check
      _
    $region10: #{iter_norm_forward.3} parent=5 // pred_check_branch
      %153 = sbr.rel (%p150) target = $region12
    $region11: #{iter_norm_forward.3} parent=5 // pred_region
      %s154 = ssub.s32 %s9, 1
      // Predicated region
      $region13: #{iter_norm_forward.3} parent=11 // pred_check
        %p155 = pneg %p84
      $region14: #{iter_norm_forward.3} parent=11 // pred_check_branch
        %157 = sbr.rel (%p155) target = $region16
      $region15: #{iter_norm_forward.3} parent=11 // pred_region
        %p158 = scmp.lt.s32.totalorder %s20, 0
        %s159 = scalar_select %p158, %s20, 0
        %s160 = smul.addr %s159, 4
        %s161 = scalar_lea.vmem %s1, %s160
      $region16: #{iter_norm_forward.3} parent=11 // pred_fallthru
        _
      // Predicated region
      $region17: #{iter_norm_forward.3} parent=11 // pred_check
        %p162 = pneg %p110
      $region18: #{iter_norm_forward.3} parent=11 // pred_check_branch
        %164 = sbr.rel (%p162) target = $region20
      $region19: #{iter_norm_forward.3} parent=11 // pred_region
        %p165 = scmp.lt.s32.totalorder %s20, 0
        %s166 = scalar_select %p165, %s20, 0
        %s167 = smul.addr %s166, 4
        %s168 = scalar_lea.vmem %s2, %s167
      $region20: #{iter_norm_forward.3} parent=11 // pred_fallthru
        _
    $region12: #{iter_norm_forward.3} parent=5 // pred_fallthru
      _
    %p169 = scmp.lt.s32.totalorder %s9, 2
    // Predicated region
    $region21: #{iter_norm_forward.3} parent=5 // pred_check
      %p170 = pneg %p169
    $region22: #{iter_norm_forward.3} parent=5 // pred_check_branch
      %172 = sbr.rel (%p170) target = $region24
    $region23: #{iter_norm_forward.3} parent=5 // pred_region
      // Predicated region
      $region25: #{iter_norm_forward.3} parent=23 // pred_check
        %p173 = pneg %p52
      $region26: #{iter_norm_forward.3} parent=23 // pred_check_branch
        %175 = sbr.rel (%p173) target = $region28
      $region27: #{iter_norm_forward.3} parent=23 // pred_region
        %s176 = smul.u32 2, %s18
        %p177 = scmp.lt.s32.totalorder %s16, 1
        %s178 = scalar_select %p177, %s16, 1
        %p179 = scmp.lt.s32.totalorder %s17, 0
        %s180 = scalar_select %p179, %s17, 0
        %p181 = scmp.lt.s32.totalorder %s176, 1
        %s182 = scalar_select %p181, %s176, 1
        %s183 = smul.addr %s180, 2
        %s184 = sadd.s32 %s182, %s183
        %s185 = smul.addr %s178, 2
        %s186 = sadd.s32 %s184, %s185
        %s187 = smul.addr %s186, 4
        %s188 = scalar_lea.vmem %s0, %s187
        %s189 = smul.u32 2, %s18
      $region28: #{iter_norm_forward.3} parent=23 // pred_fallthru
        _
    $region24: #{iter_norm_forward.3} parent=5 // pred_fallthru
      _
    %p190 = scmp.le.s32.totalorder 1, %s9
    %p191 = scmp.lt.s32.totalorder %s9, 3
    %p192 = pnand %p190, %p191
    %p193 = pneg %p192
    // Predicated region
    $region29: #{iter_norm_forward.3} parent=5 // pred_check
      _
    $region30: #{iter_norm_forward.3} parent=5 // pred_check_branch
      %195 = sbr.rel (%p192) target = $region32
    $region31: #{iter_norm_forward.3} parent=5 // pred_region
      %s196 = ssub.s32 %s9, 1
      %s197 = smul.u32 2, %s21
      %p198 = scmp.lt.s32.totalorder %s19, 1
      %s199 = scalar_select %p198, %s19, 1
      %p200 = scmp.lt.s32.totalorder %s20, 0
      %s201 = scalar_select %p200, %s20, 0
      %p202 = scmp.lt.s32.totalorder %s197, 1
      %s203 = scalar_select %p202, %s197, 1
      %s204 = smul.addr %s201, 2
      %s205 = sadd.s32 %s203, %s204
      %s206 = smul.addr %s199, 2
      %s207 = sadd.s32 %s205, %s206
      %s208 = smul.addr %s207, 4
      %s209 = scalar_lea.vmem %s0, %s208
      %p210 = pneg %p58
      %p211 = pneg %p55
      %p212 = scmp.lt.s32.totalorder %s20, 0
      %s213 = scalar_select %p212, %s20, 0
      %s214 = smul.addr %s213, 4
      %s215 = scalar_lea.vmem %s1, %s214
      %p216 = pneg %p84
      %p217 = pneg %p81
      %p218 = scmp.lt.s32.totalorder %s20, 0
      %s219 = scalar_select %p218, %s20, 0
      %s220 = smul.addr %s219, 4
      %s221 = scalar_lea.vmem %s2, %s220
      %p222 = pneg %p110
      %p223 = pneg %p107
      %p224 = pneg %p140
      %p225 = pneg %p137
      %s226 = smul.u32 2, %s21
      %p227 = scmp.lt.s32.totalorder %s19, 1
      %s228 = scalar_select %p227, %s19, 1
      %p229 = scmp.lt.s32.totalorder %s20, 0
      %s230 = scalar_select %p229, %s20, 0
      %p231 = scmp.lt.s32.totalorder %s226, 1
      %s232 = scalar_select %p231, %s226, 1
      %s233 = smul.addr %s230, 2
      %s234 = sadd.s32 %s232, %s233
      %s235 = smul.addr %s228, 2
      %s236 = sadd.s32 %s234, %s235
      %s237 = smul.addr %s236, 4
      %s238 = scalar_lea.vmem %s3, %s237
      %s239 = smul.u32 2, %s21
      %p240 = scmp.lt.s32.totalorder %s19, 1
      %s241 = scalar_select %p240, %s19, 1
      %p242 = scmp.lt.s32.totalorder %s20, 0
      %s243 = scalar_select %p242, %s20, 0
      %p244 = scmp.lt.s32.totalorder %s239, 1
      %s245 = scalar_select %p244, %s239, 1
      %s246 = smul.addr %s243, 2
      %s247 = sadd.s32 %s245, %s246
      %s248 = smul.addr %s241, 2
      %s249 = sadd.s32 %s247, %s248
      %s250 = smul.addr %s249, 4
      %s251 = scalar_lea.vmem %s0, %s250
      %s252 = smul.u32 2, %s21
      %p253 = scmp.lt.s32.totalorder %s20, 0
      %s254 = scalar_select %p253, %s20, 0
      %s255 = smul.addr %s254, 4
      %s256 = scalar_lea.vmem %s1, %s255
      %p257 = scmp.lt.s32.totalorder %s20, 0
      %s258 = scalar_select %p257, %s20, 0
      %s259 = smul.addr %s258, 4
      %s260 = scalar_lea.vmem %s2, %s259
      %s261 = smul.u32 2, %s21
      %p262 = scmp.lt.s32.totalorder %s19, 1
      %s263 = scalar_select %p262, %s19, 1
      %p264 = scmp.lt.s32.totalorder %s20, 0
      %s265 = scalar_select %p264, %s20, 0
      %p266 = scmp.lt.s32.totalorder %s261, 1
      %s267 = scalar_select %p266, %s261, 1
      %s268 = smul.addr %s265, 2
      %s269 = sadd.s32 %s267, %s268
      %s270 = smul.addr %s263, 2
      %s271 = sadd.s32 %s269, %s270
      %s272 = smul.addr %s271, 4
      %s273 = scalar_lea.vmem %s3, %s272
      %s274 = smul.u32 2, %s21
      %v275 = vld [vmem:[%s256] sm:$0xf]
      %v276 = vld [vmem:[%s251] sm:$0xff]
      %v277 = vld [vmem:[%s260] sm:$0xf]
      %279 = vset.pattern.permute.xlu0 0
      %280 = vperm.xlu0 %279, %v277
      %v281 = vpop.permute.xlu0 %280
      %v284 = vcombine.high %v276, %v276
      %vm285 = vcmask 31744
      %v287 = vsel %vm285, %v275, 0
      %vm289 = vcmask 1043456
      %v290 = vsel %vm289, %v276, 0
      %v292 = vsel %vm289, %v284, 0
      %294 = vmatprep.subr.mxu0 %v292
      %295 = vmatpush1.msra.mxu0 %v290
      %296 = vmatprep.subr.mxu0 0.0
      %297 = vmatpush1.msra.mxu0 0.0
      %298 = vmatprep.subr.mxu0 0.0
      %299 = vmatpush1.msra.mxu0 0.0
      %300 = vmatprep.subr.mxu0 0.0
      %301 = vmatpush1.msra.mxu0 0.0
      %302 = vmatprep.subr.mxu0 0.0
      %303 = vmatpush1.msra.mxu0 0.0
      %304 = vmatprep.subr.mxu0 0.0
      %305 = vmatpush1.msra.mxu0 0.0
      %306 = vmatprep.subr.mxu0 0.0
      %307 = vmatpush1.msra.mxu0 0.0
      %308 = vmatprep.subr.mxu0 0.0
      %309 = vmatpush1.msra.mxu0 0.0
      %310 = vmatprep.subr.mxu0 0.0
      %311 = vmatpush1.msra.mxu0 0.0
      %312 = vmatprep.subr.mxu0 0.0
      %313 = vmatpush1.msra.mxu0 0.0
      %314 = vmatprep.subr.mxu0 0.0
      %315 = vmatpush1.msra.mxu0 0.0
      %316 = vmatprep.subr.mxu0 0.0
      %317 = vmatpush1.msra.mxu0 0.0
      %318 = vmatprep.subr.mxu0 0.0
      %319 = vmatpush1.msra.mxu0 0.0
      %320 = vmatprep.subr.mxu0 0.0
      %321 = vmatpush1.msra.mxu0 0.0
      %322 = vmatprep.subr.mxu0 0.0
      %323 = vmatpush1.msra.mxu0 0.0
      %324 = vmatprep.subr.mxu0 0.0
      %325 = vmatpush1.msra.mxu0 0.0
      %326 = vmatprep.subr.mxu0 0.0
      %327 = vmatpush1.msra.mxu0 0.0
      %328 = vmatprep.subr.mxu0 0.0
      %329 = vmatpush1.msra.mxu0 0.0
      %330 = vmatprep.subr.mxu0 0.0
      %331 = vmatpush1.msra.mxu0 0.0
      %332 = vmatprep.subr.mxu0 0.0
      %333 = vmatpush1.msra.mxu0 0.0
      %334 = vmatprep.subr.mxu0 0.0
      %335 = vmatpush1.msra.mxu0 0.0
      %336 = vmatprep.subr.mxu0 0.0
      %337 = vmatpush1.msra.mxu0 0.0
      %338 = vmatprep.subr.mxu0 0.0
      %339 = vmatpush1.msra.mxu0 0.0
      %340 = vmatprep.subr.mxu0 0.0
      %341 = vmatpush1.msra.mxu0 0.0
      %342 = vmatprep.subr.mxu0 0.0
      %343 = vmatpush1.msra.mxu0 0.0
      %344 = vmatprep.subr.mxu0 0.0
      %345 = vmatpush1.msra.mxu0 0.0
      %346 = vmatprep.subr.mxu0 0.0
      %347 = vmatpush1.msra.mxu0 0.0
      %348 = vmatprep.subr.mxu0 0.0
      %349 = vmatpush1.msra.mxu0 0.0
      %350 = vmatprep.subr.mxu0 0.0
      %351 = vmatpush1.msra.mxu0 0.0
      %352 = vmatprep.subr.mxu0 0.0
      %353 = vmatpush1.msra.mxu0 0.0
      %354 = vmatprep.subr.mxu0 0.0
      %355 = vmatpush1.msra.mxu0 0.0
      %356 = vmatprep.subr.mxu0 0.0
      %357 = vmatpush1.msra.mxu0 0.0
      %358 = vmatprep.mubr.f32.mxu0 0.0
      %359 = vmatmul.mubr.f32.gmra.mrb[0].mxu0 %v287
      %v360 = vpop.f32.mrb[0].mxu0
      %v361 = vadd.f32 %v281, %v360
      %v362 = vpop.f32.mrb[0].mxu0
      %v363 = vadd.f32 %v281, %v362
      %364 = vdwg.mxu0
      %v367 = vcombine.low %v361, %v363
      %369 = vst [vmem:[%s273] sm:$0xff] %v367
      %s370 = smul.u32 2, %s21
      %p371 = scmp.lt.s32.totalorder %s19, 1
      %s372 = scalar_select %p371, %s19, 1
      %p373 = scmp.lt.s32.totalorder %s20, 0
      %s374 = scalar_select %p373, %s20, 0
      %p375 = scmp.lt.s32.totalorder %s370, 1
      %s376 = scalar_select %p375, %s370, 1
      %s377 = smul.addr %s374, 2
      %s378 = sadd.s32 %s376, %s377
      %s379 = smul.addr %s372, 2
      %s380 = sadd.s32 %s378, %s379
      %s381 = smul.addr %s380, 4
      %s382 = scalar_lea.vmem %s3, %s381
      // Predicated region
      $region33: #{iter_norm_forward.3} parent=31 // pred_check
        %p383 = pneg %p137
      $region34: #{iter_norm_forward.3} parent=31 // pred_check_branch
        %385 = sbr.rel (%p383) target = $region36
      $region35: #{iter_norm_forward.3} parent=31 // pred_region
        %s386 = smul.u32 2, %s21
      $region36: #{iter_norm_forward.3} parent=31 // pred_fallthru
        _
    $region32: #{iter_norm_forward.3} parent=5 // pred_fallthru
      _
    %p387 = scmp.le.s32.totalorder 2, %s9
    // Predicated region
    $region37: #{iter_norm_forward.3} parent=5 // pred_check
      %p388 = pneg %p387
    $region38: #{iter_norm_forward.3} parent=5 // pred_check_branch
      %390 = sbr.rel (%p388) target = $region40
    $region39: #{iter_norm_forward.3} parent=5 // pred_region
      %s391 = ssub.s32 %s9, 2
      // Predicated region
      $region41: #{iter_norm_forward.3} parent=39 // pred_check
        %p392 = pneg %p143
      $region42: #{iter_norm_forward.3} parent=39 // pred_check_branch
        %394 = sbr.rel (%p392) target = $region44
      $region43: #{iter_norm_forward.3} parent=39 // pred_region
        %s395 = smul.u32 2, %s24
        %p396 = scmp.lt.s32.totalorder %s22, 1
        %s397 = scalar_select %p396, %s22, 1
        %p398 = scmp.lt.s32.totalorder %s23, 0
        %s399 = scalar_select %p398, %s23, 0
        %p400 = scmp.lt.s32.totalorder %s395, 1
        %s401 = scalar_select %p400, %s395, 1
        %s402 = smul.addr %s399, 2
        %s403 = sadd.s32 %s401, %s402
        %s404 = smul.addr %s397, 2
        %s405 = sadd.s32 %s403, %s404
        %s406 = smul.addr %s405, 4
        %s407 = scalar_lea.vmem %s3, %s406
      $region44: #{iter_norm_forward.3} parent=39 // pred_fallthru
        _
    $region40: #{iter_norm_forward.3} parent=5 // pred_fallthru
      _
  $region6: #{iter_norm_forward.3} parent=0 // loop_footer
    %s13 = sadd.s32 1, %s9
  $region7: #{iter_norm_forward.3} parent=0 // loop_footer_branch
    %8 = sbr.rel target = $region3
  $region8: #{iter_norm_forward.3} parent=0 // loop_exit
    _

</llo_original>
